<compile_context>
chip_gen: v7x
topology: tpu7x:2x2x1
jax: 0.10.0
libtpu: 0.0.40
codegen_flags: <defaults>
</compile_context>

<pallas_src>
import jax
import jax.numpy as jnp
from jax.experimental import pallas as pl
from jax.experimental.pallas import tpu as pltpu


def _actor_kernel(x_ref, w1_ref, b1_ref, w2_ref, b2_ref, w3_ref, b3_ref, o_ref):
    """One batch tile of the 3-layer MLP (mask already folded into x).

    x_ref : (tb, d_in)   bf16   masked, flattened one-hot actions
    w*_ref: bf16 weights, b*_ref: f32 biases (added to f32 accumulators)
    """
    h1 = jnp.dot(x_ref[...], w1_ref[...], preferred_element_type=jnp.float32)
    h1 = jnp.maximum(h1 + b1_ref[...], 0.0)                              # f32
    h2 = jnp.dot(h1.astype(jnp.bfloat16), w2_ref[...],
                 preferred_element_type=jnp.float32)
    h2 = jnp.maximum(h2 + b2_ref[...], 0.0)                              # f32
    out = jnp.dot(h2.astype(jnp.bfloat16), w3_ref[...],
                  preferred_element_type=jnp.float32)
    o_ref[...] = (out + b3_ref[...]).astype(o_ref.dtype)


def _round_up(v, m):
    return (v + m - 1) // m * m


def autoregressive_actor_forward(onehot_action, execution_mask, params,
                                 *, tile_b=4096,
                                 vmem_budget_bytes=20 * 1024 * 1024):
    """onehot_action: (..., A-1, A); execution_mask: (..., A-1)."""
    w1, b1, w2, b2, w3, b3 = params
    a_minus_1, a = onehot_action.shape[-2:]
    d_in = a_minus_1 * a
    hidden = w1.shape[1]
    n_out = w3.shape[1]
    assert w1.shape[0] == d_in

    lead = onehot_action.shape[:-2]
    B = 1
    for s in lead:
        B *= s

    # ---- tile sizing -------------------------------------------------------
    # Per-row VMEM: double-buffered bf16 x and f32 out, plus the f32
    # intermediates h1/h2/acc (~3*H*4 B/row) that actually dominate here.
    per_row_bytes = (d_in * 2 * 2          # x, double-buffered
                     + n_out * 4 * 2       # out, double-buffered
                     + 3 * hidden * 4)     # f32 intermediates in-kernel
    rows_cap = max(8, (vmem_budget_bytes // per_row_bytes) // 8 * 8)
    tile_cap = min(max(8, (tile_b // 8) * 8), rows_cap)

    # Keep >= 2 grid steps when the batch allows it (v7x: 2 TensorCores +
    # DMA/compute overlap), and balance the tile so padding is tiny.
    min_steps = 2 if B >= 16 else 1
    n_steps = max(pl.cdiv(B, tile_cap), min_steps)
    tile_b_eff = _round_up(pl.cdiv(B, n_steps), 8)   # <= tile_cap (mult. of 8)
    B_pad = tile_b_eff * n_steps

    # ---- glue (single fusion: mask-mul -> reshape -> pad -> bf16 cast) -----
    # Folding the mask here is exact for {0,1} masks; only the bf16 cast of
    # the masked one-hot feeds the MXU.  Padding adds at most 8*n_steps-1 rows.
    x_masked = (onehot_action.astype(jnp.float32)
                * execution_mask[..., None].astype(jnp.float32))
    x_flat = x_masked.reshape(B, d_in)
    if B_pad != B:
        x_flat = jnp.pad(x_flat, ((0, B_pad - B), (0, 0)))
    x_flat = x_flat.astype(jnp.bfloat16)

    # Weights in bf16 for the MXU (flat W1), biases stay f32.
    w1_b = w1.astype(jnp.bfloat16)                         # (d_in, H)
    w2_b = w2.astype(jnp.bfloat16)                         # (H, H)
    w3_b = w3.astype(jnp.bfloat16)                         # (H, n_out)
    b1_2d = b1.reshape(1, hidden).astype(jnp.float32)
    b2_2d = b2.reshape(1, hidden).astype(jnp.float32)
    b3_2d = b3.reshape(1, n_out).astype(jnp.float32)

    flops = 2 * B_pad * (d_in * hidden + hidden * hidden + hidden * n_out)
    bytes_accessed = (B_pad * d_in * 2                                     # x
                      + (d_in * hidden + hidden * hidden + hidden * n_out) * 2
                      + (2 * hidden + n_out) * 4                           # biases
                      + B_pad * n_out * 4)                                 # out
    cost = pl.CostEstimate(flops=flops, transcendentals=0,
                           bytes_accessed=bytes_accessed)

    # TODO(synk): output last dim (n_agents) < 128 lanes -> masked partial
    # stores; only repack to a lane-dense layout if profiling shows the tiny
    # output store path exposed (it is dwarfed by the x input stream here).
    out = pl.pallas_call(
        _actor_kernel,
        out_shape=jax.ShapeDtypeStruct((B_pad, n_out), jnp.float32),
        grid_spec=pltpu.PrefetchScalarGridSpec(
            num_scalar_prefetch=0,
            grid=(n_steps,),
            in_specs=[
                pl.BlockSpec((tile_b_eff, d_in), lambda i: (i, 0)),   # x (bf16)
                pl.BlockSpec((d_in, hidden), lambda i: (0, 0)),       # W1
                pl.BlockSpec((1, hidden), lambda i: (0, 0)),          # b1
                pl.BlockSpec((hidden, hidden), lambda i: (0, 0)),     # W2
                pl.BlockSpec((1, hidden), lambda i: (0, 0)),          # b2
                pl.BlockSpec((hidden, n_out), lambda i: (0, 0)),      # W3
                pl.BlockSpec((1, n_out), lambda i: (0, 0)),           # b3
            ],
            out_specs=pl.BlockSpec((tile_b_eff, n_out), lambda i: (i, 0)),
        ),
        compiler_params=pltpu.CompilerParams(
            dimension_semantics=("parallel",),
            vmem_limit_bytes=32 * 1024 * 1024),
        cost_estimate=cost,
    )(x_flat, w1_b, b1_2d, w2_b, b2_2d, w3_b, b3_2d)

    return out[:B].reshape(*lead, n_out)


def init_params(key, n_agents, hidden=64):
    """Deterministic init mimicking nn.Linear shapes; stored as (in, out)."""
    d_in = (n_agents - 1) * n_agents
    k1, k2, k3, k4, k5, k6 = jax.random.split(key, 6)

    def lin(kw, kb, fan_in, fan_out):
        bound = 1.0 / (fan_in ** 0.5)
        w = jax.random.uniform(kw, (fan_in, fan_out), jnp.float32, -bound, bound)
        b = jax.random.uniform(kb, (fan_out,), jnp.float32, -bound, bound)
        return w, b

    w1, b1 = lin(k1, k2, d_in, hidden)
    w2, b2 = lin(k3, k4, hidden, hidden)
    w3, b3 = lin(k5, k6, hidden, n_agents)
    return (w1, b1, w2, b2, w3, b3)


def reference_forward(onehot_action, execution_mask, params):
    """Pure-JAX f32 reference matching the PyTorch module."""
    w1, b1, w2, b2, w3, b3 = params
    x = onehot_action * execution_mask[..., None]
    x = x.reshape(*x.shape[:-2], -1)
    h1 = jnp.maximum(x @ w1 + b1, 0.0)
    h2 = jnp.maximum(h1 @ w2 + b2, 0.0)
    return h2 @ w3 + b3


if __name__ == "__main__":
    n_agents = 4
    batch = 12   # deliberately not a power of two: exercises the padding path

    key = jax.random.PRNGKey(0)
    k_params, k_act, k_mask = jax.random.split(key, 3)

    params = init_params(k_params, n_agents)

    # one-hot actions for each of the (n_agents - 1) previous agents
    idx = jax.random.randint(k_act, (batch, n_agents - 1), 0, n_agents)
    onehot_action = jax.nn.one_hot(idx, n_agents, dtype=jnp.float32)   # (B, A-1, A)
    execution_mask = (jax.random.uniform(k_mask, (batch, n_agents - 1)) > 0.5
                      ).astype(jnp.float32)                            # (B, A-1)

    out = autoregressive_actor_forward(onehot_action, execution_mask, params)
    out = jax.block_until_ready(out)

    ref = reference_forward(onehot_action, execution_mask, params)
    assert out.shape == (batch, n_agents)
    # bf16 weights/activations on the MXU -> ~1e-3 relative rounding vs f32 ref.
    assert jnp.allclose(out, ref, atol=5e-2, rtol=5e-2), "mismatch vs reference"

    print("KERNEL_OK")
</pallas_src>

<mosaic_0001>
module attributes {stable_mosaic.version = 11 : i64} {
  func.func @_actor_kernel(%arg0: i32, %arg1: memref<16x12xbf16, #tpu.memory_space<vmem>>, %arg2: memref<12x64xbf16, #tpu.memory_space<vmem>>, %arg3: memref<1x64xf32, #tpu.memory_space<vmem>>, %arg4: memref<64x64xbf16, #tpu.memory_space<vmem>>, %arg5: memref<1x64xf32, #tpu.memory_space<vmem>>, %arg6: memref<64x4xbf16, #tpu.memory_space<vmem>>, %arg7: memref<1x4xf32, #tpu.memory_space<vmem>>, %arg8: memref<16x4xf32, #tpu.memory_space<vmem>>) attributes {dimension_semantics = [#tpu.dimension_semantics<parallel>], iteration_bounds = array<i64: 1>, scalar_prefetch = 0 : i64, scratch_operands = 0 : i64, tpu.core_type = #tpu.core_type<tc>, window_params = [{transform_indices = @transform_0, window_bounds = array<i64: 16, 12>}, {pipeline_mode = #tpu.pipeline_mode<synchronous>, transform_indices = @transform_1, window_bounds = array<i64: 12, 64>}, {pipeline_mode = #tpu.pipeline_mode<synchronous>, transform_indices = @transform_2, window_bounds = array<i64: 1, 64>}, {pipeline_mode = #tpu.pipeline_mode<synchronous>, transform_indices = @transform_3, window_bounds = array<i64: 64, 64>}, {pipeline_mode = #tpu.pipeline_mode<synchronous>, transform_indices = @transform_4, window_bounds = array<i64: 1, 64>}, {pipeline_mode = #tpu.pipeline_mode<synchronous>, transform_indices = @transform_5, window_bounds = array<i64: 64, 4>}, {pipeline_mode = #tpu.pipeline_mode<synchronous>, transform_indices = @transform_6, window_bounds = array<i64: 1, 4>}, {transform_indices = @transform_7, window_bounds = array<i64: 16, 4>}]} {
    %c0 = arith.constant 0 : index
    %c0_0 = arith.constant 0 : index
    %0 = vector.load %arg1[%c0, %c0_0] : memref<16x12xbf16, #tpu.memory_space<vmem>>, vector<16x12xbf16>
    %c0_1 = arith.constant 0 : index
    %c0_2 = arith.constant 0 : index
    %1 = vector.load %arg2[%c0_1, %c0_2] : memref<12x64xbf16, #tpu.memory_space<vmem>>, vector<12x64xbf16>
    %cst = arith.constant dense<0.000000e+00> : vector<16x64xf32>
    %2 = tpu.matmul %0, %1, %cst {dimension_numbers = #tpu.dot_dimension_numbers<[1], [0], [0], [1], [0, 0, 1, 1], [], []>} : vector<16x12xbf16>, vector<12x64xbf16>, vector<16x64xf32> -> vector<16x64xf32>
    %c0_3 = arith.constant 0 : index
    %c0_4 = arith.constant 0 : index
    %3 = vector.load %arg3[%c0_3, %c0_4] : memref<1x64xf32, #tpu.memory_space<vmem>>, vector<1x64xf32>
    %4 = vector.broadcast %3 : vector<1x64xf32> to vector<16x64xf32>
    %5 = arith.addf %2, %4 : vector<16x64xf32>
    %cst_5 = arith.constant 0.000000e+00 : f32
    %6 = vector.broadcast %cst_5 : f32 to vector<16x64xf32>
    %7 = arith.maximumf %5, %6 : vector<16x64xf32>
    %8 = arith.truncf %7 : vector<16x64xf32> to vector<16x64xbf16>
    %c0_6 = arith.constant 0 : index
    %c0_7 = arith.constant 0 : index
    %9 = vector.load %arg4[%c0_6, %c0_7] : memref<64x64xbf16, #tpu.memory_space<vmem>>, vector<64x64xbf16>
    %cst_8 = arith.constant dense<0.000000e+00> : vector<16x64xf32>
    %10 = tpu.matmul %8, %9, %cst_8 {dimension_numbers = #tpu.dot_dimension_numbers<[1], [0], [0], [1], [0, 0, 1, 1], [], []>} : vector<16x64xbf16>, vector<64x64xbf16>, vector<16x64xf32> -> vector<16x64xf32>
    %c0_9 = arith.constant 0 : index
    %c0_10 = arith.constant 0 : index
    %11 = vector.load %arg5[%c0_9, %c0_10] : memref<1x64xf32, #tpu.memory_space<vmem>>, vector<1x64xf32>
    %12 = vector.broadcast %11 : vector<1x64xf32> to vector<16x64xf32>
    %13 = arith.addf %10, %12 : vector<16x64xf32>
    %cst_11 = arith.constant 0.000000e+00 : f32
    %14 = vector.broadcast %cst_11 : f32 to vector<16x64xf32>
    %15 = arith.maximumf %13, %14 : vector<16x64xf32>
    %16 = arith.truncf %15 : vector<16x64xf32> to vector<16x64xbf16>
    %c0_12 = arith.constant 0 : index
    %c0_13 = arith.constant 0 : index
    %17 = vector.load %arg6[%c0_12, %c0_13] : memref<64x4xbf16, #tpu.memory_space<vmem>>, vector<64x4xbf16>
    %cst_14 = arith.constant dense<0.000000e+00> : vector<16x4xf32>
    %18 = tpu.matmul %16, %17, %cst_14 {dimension_numbers = #tpu.dot_dimension_numbers<[1], [0], [0], [1], [0, 0, 1, 1], [], []>} : vector<16x64xbf16>, vector<64x4xbf16>, vector<16x4xf32> -> vector<16x4xf32>
    %c0_15 = arith.constant 0 : index
    %c0_16 = arith.constant 0 : index
    %19 = vector.load %arg7[%c0_15, %c0_16] : memref<1x4xf32, #tpu.memory_space<vmem>>, vector<1x4xf32>
    %20 = vector.broadcast %19 : vector<1x4xf32> to vector<16x4xf32>
    %21 = arith.addf %18, %20 : vector<16x4xf32>
    %c0_17 = arith.constant 0 : index
    %c0_18 = arith.constant 0 : index
    %22 = vector.load %arg8[%c0_17, %c0_18] : memref<16x4xf32, #tpu.memory_space<vmem>>, vector<16x4xf32>
    tpu.vector_store %arg8[%c0_17, %c0_18], %21 {strides = array<i32>} : memref<16x4xf32, #tpu.memory_space<vmem>>, vector<16x4xf32>,
    return
  }
  func.func @transform_0(%arg0: i32) -> (i32, i32) {
    %c0_i32 = arith.constant 0 : i32
    %c0_i32_0 = arith.constant 0 : i32
    return %arg0, %c0_i32 : i32, i32
  }
  func.func @transform_1(%arg0: i32) -> (i32, i32) {
    %c0_i32 = arith.constant 0 : i32
    %c0_i32_0 = arith.constant 0 : i32
    %c0_i32_1 = arith.constant 0 : i32
    return %c0_i32, %c0_i32_0 : i32, i32
  }
  func.func @transform_2(%arg0: i32) -> (i32, i32) {
    %c0_i32 = arith.constant 0 : i32
    %c0_i32_0 = arith.constant 0 : i32
    %c0_i32_1 = arith.constant 0 : i32
    return %c0_i32, %c0_i32_0 : i32, i32
  }
  func.func @transform_3(%arg0: i32) -> (i32, i32) {
    %c0_i32 = arith.constant 0 : i32
    %c0_i32_0 = arith.constant 0 : i32
    %c0_i32_1 = arith.constant 0 : i32
    return %c0_i32, %c0_i32_0 : i32, i32
  }
  func.func @transform_4(%arg0: i32) -> (i32, i32) {
    %c0_i32 = arith.constant 0 : i32
    %c0_i32_0 = arith.constant 0 : i32
    %c0_i32_1 = arith.constant 0 : i32
    return %c0_i32, %c0_i32_0 : i32, i32
  }
  func.func @transform_5(%arg0: i32) -> (i32, i32) {
    %c0_i32 = arith.constant 0 : i32
    %c0_i32_0 = arith.constant 0 : i32
    %c0_i32_1 = arith.constant 0 : i32
    return %c0_i32, %c0_i32_0 : i32, i32
  }
  func.func @transform_6(%arg0: i32) -> (i32, i32) {
    %c0_i32 = arith.constant 0 : i32
    %c0_i32_0 = arith.constant 0 : i32
    %c0_i32_1 = arith.constant 0 : i32
    return %c0_i32, %c0_i32_0 : i32, i32
  }
  func.func @transform_7(%arg0: i32) -> (i32, i32) {
    %c0_i32 = arith.constant 0 : i32
    %c0_i32_0 = arith.constant 0 : i32
    return %arg0, %c0_i32 : i32, i32
  }
}

</mosaic_0001>

<llo_original>
// kernel: tpu_custom_call.1
$region0: #{tpu_custom_call.1}
  #allocation0 [shape = 'u32[]', space=smem, size = 0x4, offset = 0x4, fixed_abs, tag = 'smem constant byte address 0x4 - core index']
  #allocation1 [shape = 'u32[144,128]{1,0:T(1,128)}', space=vmem, size = 0x12000, scoped, tag = 'internal scratch']
  %s0 = inlined_call_operand.vmem [shape: bf16[16,12], index: 0, kind: input, shape index: {}]
  %s1 = inlined_call_operand.hbm [shape: bf16[12,64], index: 1, kind: input, shape index: {}]
  %s2 = inlined_call_operand.vmem [shape: f32[1,64], index: 2, kind: input, shape index: {}]
  %s3 = inlined_call_operand.vmem [shape: bf16[64,64], index: 3, kind: input, shape index: {}]
  %s4 = inlined_call_operand.vmem [shape: f32[1,64], index: 4, kind: input, shape index: {}]
  %s5 = inlined_call_operand.vmem [shape: bf16[64,4], index: 5, kind: input, shape index: {}]
  %s6 = inlined_call_operand.vmem [shape: f32[1,4], index: 6, kind: input, shape index: {}]
  %s7 = inlined_call_operand.vmem [shape: f32[16,4], index: 7, kind: output, shape index: {}]
  %s8 = sld [smem:[#allocation0]]
  $region42: #{tpu_custom_call.1} parent=0
    _
  %s10 = ssub.s32 1, %s8
  %s11 = scalar_select 0, %s10, %s8
  $region1: #{tpu_custom_call.1} parent=0
    #allocation2 [shape = 'u8[4096]{0}', space=vmem, size = 0x1000, scoped, tag = 'input window, operand 1, single buffered']
    #allocation3 [shape = 's32[1]{0}', space=sflag, size = 0x4, scoped, tag = 'scoped memory for tpu_custom_call.1']
    %12 = vsyncpa [#allocation3], 0
    // Predicated region
    $region2: #{tpu_custom_call.1} parent=1 // pred_check
      _
    $region3: #{tpu_custom_call.1} parent=1 // pred_check_branch
      %14 = sbr.rel (0) target = $region5
    $region4: #{tpu_custom_call.1} parent=1 // pred_region
      _
    $region5: #{tpu_custom_call.1} parent=1 // pred_fallthru
      _
    // Predicated region
    $region6: #{tpu_custom_call.1} parent=1 // pred_check
      _
    $region7: #{tpu_custom_call.1} parent=1 // pred_check_branch
      %16 = sbr.rel (0) target = $region9
    $region8: #{tpu_custom_call.1} parent=1 // pred_region
      %s18 = ssub.s32 128, 128
      %19 = vsyncadd [#allocation3], %s18
      %s20 = sshll.u32 [#allocation2], 4
      %s21 = int_to_ptr.vmem [resolvable:$true] %s20
      %26 = dma.hbm_to_vmem [thread:$0]  %s1, 128, %s21, [#allocation3], 64, 64, 4
    $region9: #{tpu_custom_call.1} parent=1 // pred_fallthru
      _
    // Predicated region
    $region10: #{tpu_custom_call.1} parent=1 // pred_check
      _
    $region11: #{tpu_custom_call.1} parent=1 // pred_check_branch
      %28 = sbr.rel (0) target = $region13
    $region12: #{tpu_custom_call.1} parent=1 // pred_region
      _
    $region13: #{tpu_custom_call.1} parent=1 // pred_fallthru
      _
    // Predicated region
    $region14: #{tpu_custom_call.1} parent=1 // pred_check
      _
    $region15: #{tpu_custom_call.1} parent=1 // pred_check_branch
      %30 = sbr.rel (0) target = $region17
    $region16: #{tpu_custom_call.1} parent=1 // pred_region
      _
    $region17: #{tpu_custom_call.1} parent=1 // pred_fallthru
      _
    // Predicated region
    $region18: #{tpu_custom_call.1} parent=1 // pred_check
      _
    $region19: #{tpu_custom_call.1} parent=1 // pred_check_branch
      %32 = sbr.rel (0) target = $region21
    $region20: #{tpu_custom_call.1} parent=1 // pred_region
      _
    $region21: #{tpu_custom_call.1} parent=1 // pred_fallthru
      _
    // Predicated region
    $region22: #{tpu_custom_call.1} parent=1 // pred_check
      _
    $region23: #{tpu_custom_call.1} parent=1 // pred_check_branch
      %34 = sbr.rel (0) target = $region25
    $region24: #{tpu_custom_call.1} parent=1 // pred_region
      _
    $region25: #{tpu_custom_call.1} parent=1 // pred_fallthru
      _
    // Predicated region
    $region26: #{tpu_custom_call.1} parent=1 // pred_check
      _
    $region27: #{tpu_custom_call.1} parent=1 // pred_check_branch
      %36 = sbr.rel (0) target = $region29
    $region28: #{tpu_custom_call.1} parent=1 // pred_region
      _
    $region29: #{tpu_custom_call.1} parent=1 // pred_fallthru
      _
    // Predicated region
    $region30: #{tpu_custom_call.1} parent=1 // pred_check
      _
    $region31: #{tpu_custom_call.1} parent=1 // pred_check_branch
      %38 = sbr.rel (0) target = $region33
    $region32: #{tpu_custom_call.1} parent=1 // pred_region
      %39 = dma.done [#allocation3], 128
    $region33: #{tpu_custom_call.1} parent=1 // pred_fallthru
      _
    %v41 = vld [vmem:[%s0] sm:$0xf]
    %v42 = vld [vmem:[%s0 + $0x4] sm:$0xf]
    %v43 = vld [vmem:[#allocation2] sm:$0xf]
    %v44 = vld [vmem:[#allocation2 + $0x4] sm:$0x3]
    %v45 = vld [vmem:[%s2] sm:$0x1]
    %v47 = vlaneseq
    %v48 = vshrl.u32 %v47, 7
    %v49 = vsub.s32 0, %v48
    %v50 = vrot.slane %v45, %v49
    %v54 = vunpack.c.l.b16 %v41
    %v55 = vunpack.c.l.b16 %v42
    %v56 = vpack.c.b16 %v55, %v54
    %v59 = vunpack.c.l.b16 %v43
    %v60 = vunpack.c.l.b16 %v44
    %v61 = vpack.c.b16 %v60, %v59
    %vm62 = vcmask 97280
    %v64 = vsel %vm62, %v56, 0
    %vm66 = vcmask 1045504
    %v68 = vsel %vm66, %v61, 0
    %70 = vmatprep.subr.bf16.mxu0 0
    %71 = vmatpush1.bf16.msra.mxu0 %v68
    %72 = vmatprep.subr.bf16.mxu0 0
    %73 = vmatpush1.bf16.msra.mxu0 0
    %74 = vmatprep.subr.bf16.mxu0 0
    %75 = vmatpush1.bf16.msra.mxu0 0
    %76 = vmatprep.subr.bf16.mxu0 0
    %77 = vmatpush1.bf16.msra.mxu0 0
    %78 = vmatprep.subr.bf16.mxu0 0
    %79 = vmatpush1.bf16.msra.mxu0 0
    %80 = vmatprep.subr.bf16.mxu0 0
    %81 = vmatpush1.bf16.msra.mxu0 0
    %82 = vmatprep.subr.bf16.mxu0 0
    %83 = vmatpush1.bf16.msra.mxu0 0
    %84 = vmatprep.subr.bf16.mxu0 0
    %85 = vmatpush1.bf16.msra.mxu0 0
    %86 = vmatprep.subr.bf16.mxu0 0
    %87 = vmatpush1.bf16.msra.mxu0 0
    %88 = vmatprep.subr.bf16.mxu0 0
    %89 = vmatpush1.bf16.msra.mxu0 0
    %90 = vmatprep.subr.bf16.mxu0 0
    %91 = vmatpush1.bf16.msra.mxu0 0
    %92 = vmatprep.subr.bf16.mxu0 0
    %93 = vmatpush1.bf16.msra.mxu0 0
    %94 = vmatprep.subr.bf16.mxu0 0
    %95 = vmatpush1.bf16.msra.mxu0 0
    %96 = vmatprep.subr.bf16.mxu0 0
    %97 = vmatpush1.bf16.msra.mxu0 0
    %98 = vmatprep.subr.bf16.mxu0 0
    %99 = vmatpush1.bf16.msra.mxu0 0
    %100 = vmatprep.subr.bf16.mxu0 0
    %101 = vmatpush1.bf16.msra.mxu0 0
    %102 = vmatprep.mubr.bf16.mxu0 0
    %103 = vmatmul.mubr.bf16.gmra.mrb[0].mxu0 %v64
    %v104 = vpop.f32.mrb[0].mxu0
    %v105 = vadd.f32 %v50, %v104
    %v106 = vpop.f32.mrb[0].mxu0
    %v107 = vpop.f32.mrb[0].mxu0
    %v108 = vadd.f32 %v50, %v107
    %v109 = vpop.f32.mrb[0].mxu0
    %110 = vdwg.mxu0
    %v111 = vmax.f32 %v105, 0.0
    %v112 = vmax.f32 %v108, 0.0
    %v113 = vpack.c.bf16 %v112, %v111
    %v114 = vld [vmem:[%s3] sm:$0xf]
    %v115 = vld [vmem:[%s3 + $0x4] sm:$0xf]
    %v116 = vld [vmem:[%s3 + $0x8] sm:$0xf]
    %v117 = vld [vmem:[%s3 + $0xc] sm:$0xf]
    %v118 = vld [vmem:[%s3 + $0x10] sm:$0xf]
    %v119 = vld [vmem:[%s3 + $0x14] sm:$0xf]
    %v120 = vld [vmem:[%s3 + $0x18] sm:$0xf]
    %v121 = vld [vmem:[%s3 + $0x1c] sm:$0xf]
    %v122 = vld [vmem:[%s4] sm:$0x1]
    %v124 = vlaneseq
    %v125 = vshrl.u32 %v124, 7
    %v126 = vsub.s32 0, %v125
    %v127 = vrot.slane %v122, %v126
    %v137 = vunpack.c.l.b16 %v114
    %v138 = vunpack.c.l.b16 %v115
    %v139 = vunpack.c.l.b16 %v116
    %v140 = vunpack.c.l.b16 %v117
    %v141 = vunpack.c.l.b16 %v118
    %v142 = vunpack.c.l.b16 %v119
    %v143 = vunpack.c.l.b16 %v120
    %v144 = vunpack.c.l.b16 %v121
    %v145 = vpack.c.b16 %v138, %v137
    %v146 = vpack.c.b16 %v140, %v139
    %v147 = vpack.c.b16 %v142, %v141
    %v148 = vpack.c.b16 %v144, %v143
    %vm153 = vcmask 523264
    %v155 = vsel %vm153, %v113, 0
    %157 = vmatprep.subr.bf16.mxu0 0
    %158 = vmatpush1.bf16.msra.mxu0 %v145
    %159 = vmatprep.subr.bf16.mxu0 0
    %160 = vmatpush1.bf16.msra.mxu0 %v146
    %161 = vmatprep.subr.bf16.mxu0 0
    %162 = vmatpush1.bf16.msra.mxu0 %v147
    %163 = vmatprep.subr.bf16.mxu0 0
    %164 = vmatpush1.bf16.msra.mxu0 %v148
    %165 = vmatprep.subr.bf16.mxu0 0
    %166 = vmatpush1.bf16.msra.mxu0 0
    %167 = vmatprep.subr.bf16.mxu0 0
    %168 = vmatpush1.bf16.msra.mxu0 0
    %169 = vmatprep.subr.bf16.mxu0 0
    %170 = vmatpush1.bf16.msra.mxu0 0
    %171 = vmatprep.subr.bf16.mxu0 0
    %172 = vmatpush1.bf16.msra.mxu0 0
    %173 = vmatprep.subr.bf16.mxu0 0
    %174 = vmatpush1.bf16.msra.mxu0 0
    %175 = vmatprep.subr.bf16.mxu0 0
    %176 = vmatpush1.bf16.msra.mxu0 0
    %177 = vmatprep.subr.bf16.mxu0 0
    %178 = vmatpush1.bf16.msra.mxu0 0
    %179 = vmatprep.subr.bf16.mxu0 0
    %180 = vmatpush1.bf16.msra.mxu0 0
    %181 = vmatprep.subr.bf16.mxu0 0
    %182 = vmatpush1.bf16.msra.mxu0 0
    %183 = vmatprep.subr.bf16.mxu0 0
    %184 = vmatpush1.bf16.msra.mxu0 0
    %185 = vmatprep.subr.bf16.mxu0 0
    %186 = vmatpush1.bf16.msra.mxu0 0
    %187 = vmatprep.subr.bf16.mxu0 0
    %188 = vmatpush1.bf16.msra.mxu0 0
    %189 = vmatprep.mubr.bf16.mxu0 0
    %190 = vmatmul.mubr.bf16.gmra.mrb[0].mxu0 %v155
    %v191 = vpop.f32.mrb[0].mxu0
    %v192 = vadd.f32 %v127, %v191
    %v193 = vpop.f32.mrb[0].mxu0
    %v194 = vpop.f32.mrb[0].mxu0
    %v195 = vadd.f32 %v127, %v194
    %v196 = vpop.f32.mrb[0].mxu0
    %197 = vdwg.mxu0
    %v198 = vmax.f32 %v192, 0.0
    %v199 = vmax.f32 %v195, 0.0
    %v200 = vpack.c.bf16 %v199, %v198
    %v201 = vld [vmem:[%s5] sm:$0xf]
    %v202 = vld [vmem:[%s5 + $0x4] sm:$0xf]
    %v203 = vld [vmem:[%s5 + $0x8] sm:$0xf]
    %v204 = vld [vmem:[%s5 + $0xc] sm:$0xf]
    %v205 = vld [vmem:[%s5 + $0x10] sm:$0xf]
    %v206 = vld [vmem:[%s5 + $0x14] sm:$0xf]
    %v207 = vld [vmem:[%s5 + $0x18] sm:$0xf]
    %v208 = vld [vmem:[%s5 + $0x1c] sm:$0xf]
    %v209 = vld [vmem:[%s6] sm:$0x1]
    %v211 = vlaneseq
    %v212 = vshrl.u32 %v211, 7
    %v213 = vsub.s32 0, %v212
    %v214 = vrot.slane %v209, %v213
    %v224 = vunpack.c.l.b16 %v201
    %v225 = vunpack.c.l.b16 %v202
    %v226 = vunpack.c.l.b16 %v203
    %v227 = vunpack.c.l.b16 %v204
    %v228 = vunpack.c.l.b16 %v205
    %v229 = vunpack.c.l.b16 %v206
    %v230 = vunpack.c.l.b16 %v207
    %v231 = vunpack.c.l.b16 %v208
    %v232 = vpack.c.b16 %v225, %v224
    %v233 = vpack.c.b16 %v227, %v226
    %v234 = vpack.c.b16 %v229, %v228
    %v235 = vpack.c.b16 %v231, %v230
    %v241 = vsel %vm153, %v200, 0
    %243 = vmatprep.subr.bf16.mxu0 0
    %244 = vmatpush1.bf16.msra.mxu0 %v232
    %245 = vmatprep.subr.bf16.mxu0 0
    %246 = vmatpush1.bf16.msra.mxu0 %v233
    %247 = vmatprep.subr.bf16.mxu0 0
    %248 = vmatpush1.bf16.msra.mxu0 %v234
    %249 = vmatprep.subr.bf16.mxu0 0
    %250 = vmatpush1.bf16.msra.mxu0 %v235
    %251 = vmatprep.subr.bf16.mxu0 0
    %252 = vmatpush1.bf16.msra.mxu0 0
    %253 = vmatprep.subr.bf16.mxu0 0
    %254 = vmatpush1.bf16.msra.mxu0 0
    %255 = vmatprep.subr.bf16.mxu0 0
    %256 = vmatpush1.bf16.msra.mxu0 0
    %257 = vmatprep.subr.bf16.mxu0 0
    %258 = vmatpush1.bf16.msra.mxu0 0
    %259 = vmatprep.subr.bf16.mxu0 0
    %260 = vmatpush1.bf16.msra.mxu0 0
    %261 = vmatprep.subr.bf16.mxu0 0
    %262 = vmatpush1.bf16.msra.mxu0 0
    %263 = vmatprep.subr.bf16.mxu0 0
    %264 = vmatpush1.bf16.msra.mxu0 0
    %265 = vmatprep.subr.bf16.mxu0 0
    %266 = vmatpush1.bf16.msra.mxu0 0
    %267 = vmatprep.subr.bf16.mxu0 0
    %268 = vmatpush1.bf16.msra.mxu0 0
    %269 = vmatprep.subr.bf16.mxu0 0
    %270 = vmatpush1.bf16.msra.mxu0 0
    %271 = vmatprep.subr.bf16.mxu0 0
    %272 = vmatpush1.bf16.msra.mxu0 0
    %273 = vmatprep.subr.bf16.mxu0 0
    %274 = vmatpush1.bf16.msra.mxu0 0
    %275 = vmatprep.mubr.bf16.mxu0 0
    %276 = vmatmul.mubr.bf16.gmra.mrb[0].mxu0 %v241
    %v277 = vpop.f32.mrb[0].mxu0
    %v278 = vadd.f32 %v214, %v277
    %v279 = vpop.f32.mrb[0].mxu0
    %v280 = vpop.f32.mrb[0].mxu0
    %v281 = vadd.f32 %v214, %v280
    %v282 = vpop.f32.mrb[0].mxu0
    %283 = vdwg.mxu0
    %vm284 = vcmask 31744
    %285 = vst.msk [vmem:[%s7] sm:$0xff] %vm284, %v278
    %286 = vst.msk [vmem:[%s7 + $0x8] sm:$0xff] %vm284, %v281
    // Predicated region
    $region34: #{tpu_custom_call.1} parent=1 // pred_check
      _
    $region35: #{tpu_custom_call.1} parent=1 // pred_check_branch
      %288 = sbr.rel (0) target = $region37
    $region36: #{tpu_custom_call.1} parent=1 // pred_region
      _
    $region37: #{tpu_custom_call.1} parent=1 // pred_fallthru
      _
    // Predicated region
    $region38: #{tpu_custom_call.1} parent=1 // pred_check
      _
    $region39: #{tpu_custom_call.1} parent=1 // pred_check_branch
      %290 = sbr.rel (0) target = $region41
    $region40: #{tpu_custom_call.1} parent=1 // pred_region
      _
    $region41: #{tpu_custom_call.1} parent=1 // pred_fallthru
      _
    %291 = vsyncpa [#allocation3], 1

</llo_original>
